<compile_context>
chip_gen: v5e
topology: v5e:2x2
jax: 0.10.0
libtpu: 0.0.40
codegen_flags: <defaults>
</compile_context>

<pallas_src>
import math

import jax
import jax.numpy as jnp
from jax import lax
from jax.experimental import pallas as pl
from jax.experimental.pallas import tpu as pltpu


def _round_up(x, m):
    return (x + m - 1) // m * m


def _default_block_rows():
    # v7x has ~2.3x v6e's HBM bandwidth, so per-step DMA shrinks relative to
    # the fixed ~0.35 us grid-step overhead -> use bigger row tiles there.
    # Proxy for v7x: per-core VMEM capacity <= 64 MiB (v5e/v6e report 128 MiB).
    try:
        info = pltpu.get_tpu_info()
        vmem = getattr(info, "vmem_capacity_bytes", None)
        if vmem is not None and vmem <= 64 * 1024 * 1024:
            return 2048
    except Exception:
        pass
    return 1024


def _temporal_decay_kernel(d_ref, w_ref, b_ref, o_ref):
    # d_ref: (tm, in_size), w_ref: (hid, in_size), b_ref: (1, hid),
    # o_ref: (tm, hid)
    # Contract d's last dim against W's last dim (== F.linear, no transpose);
    # the MXU handles the orientation natively, accumulate in f32.
    x = lax.dot_general(
        d_ref[...], w_ref[...],
        dimension_numbers=(((1,), (1,)), ((), ())),
        preferred_element_type=jnp.float32,
    )
    x = x + b_ref[...]                                 # broadcast (1, hid)
    gamma = jnp.maximum(x, 0.0)                        # relu (VPU, f32)
    o_ref[...] = jnp.exp(-gamma).astype(o_ref.dtype)   # exp on EUP, f32


def temporal_decay(d, W, b, *, block_rows=None, compute_dtype=None,
                   out_dtype=None):
    """gamma = exp(-relu(F.linear(d, W, b))) via a Pallas TPU kernel.

    d: (N, input_size)            -- N may be batch, or batch*timesteps stacked
    W: (rnn_hid_size, input_size) -- passed untransposed, as in the nn.Module
    b: (rnn_hid_size,)
    compute_dtype: optional (e.g. jnp.bfloat16) for the matmul operands only;
                   accumulation and the epilogue stay in f32.
    returns gamma: (N, rnn_hid_size) in out_dtype (default: d.dtype)
    """
    N, in_size = d.shape
    hid, in_size_w = W.shape
    assert in_size == in_size_w
    assert b.shape == (hid,)

    if out_dtype is None:
        out_dtype = d.dtype
    if compute_dtype is not None:
        d = d.astype(compute_dtype)
        W = W.astype(compute_dtype)

    if block_rows is None:
        block_rows = _default_block_rows()

    # Row tile: multiple of 8 (robust to any block_rows), at most ~block_rows,
    # and -- when N allows -- small enough that the row grid has >= 2 steps so
    # v7x's 2 TensorCores both get work (neutral on single-TC v5e/v6e).
    tm = _round_up(max(1, min(block_rows, N)), 8)
    if N > 8:
        tm = min(tm, _round_up(pl.cdiv(N, 2), 8))
    n_pad = _round_up(N, tm)

    # Row padding only if needed (the common stacked-timesteps path needs none).
    d_p = d if n_pad == N else jnp.pad(d, ((0, n_pad - N), (0, 0)))
    b2 = b.reshape(1, hid)

    grid = (n_pad // tm,)

    out = pl.pallas_call(
        _temporal_decay_kernel,
        out_shape=jax.ShapeDtypeStruct((n_pad, hid), out_dtype),
        grid=grid,
        in_specs=[
            # Rows tiled; last block dim == full array dim -> legal, no HBM pad.
            pl.BlockSpec((tm, in_size), lambda i: (i, 0)),
            # Weights & bias resident (constant block index) -> single buffer.
            pl.BlockSpec((hid, in_size), lambda i: (0, 0),
                         pipeline_mode=pl.Buffered(1)),
            pl.BlockSpec((1, hid), lambda i: (0, 0),
                         pipeline_mode=pl.Buffered(1)),
        ],
        out_specs=pl.BlockSpec((tm, hid), lambda i: (i, 0)),
        compiler_params=pltpu.CompilerParams(
            # Row axis is independent -> shards across v7x's 2 TCs.
            dimension_semantics=("parallel",),
        ),
    )(d_p, W, b2)

    return out if n_pad == N else out[:N]


def temporal_decay_fused(d, Ws, bs, *, block_rows=None, compute_dtype=None):
    """Run several TemporalDecay heads sharing the same input d in ONE kernel
    call by concatenating their weights along the output (hidden) dim.

    Ws: sequence of (hid_k, input_size) weights; bs: sequence of (hid_k,) biases.
    Returns a tuple of gammas, one per head.
    """
    hids = [W.shape[0] for W in Ws]
    W_cat = jnp.concatenate(list(Ws), axis=0)   # (sum(hids), input_size)
    b_cat = jnp.concatenate(list(bs), axis=0)   # (sum(hids),)
    out = temporal_decay(d, W_cat, b_cat, block_rows=block_rows,
                         compute_dtype=compute_dtype)
    gammas = []
    start = 0
    for h in hids:
        gammas.append(out[:, start:start + h])
        start += h
    return tuple(gammas)


def temporal_decay_ref(d, W, b):
    # pure-JAX reference for correctness check
    gamma = jnp.maximum(d @ W.T + b, 0.0)
    return jnp.exp(-gamma)


if __name__ == "__main__":
    # Small shapes consistent with the module, but batched across timesteps:
    # B=8 sequences x T=24 timesteps stacked into N=192 rows.
    B, T, INPUT_SIZE, RNN_HID = 8, 24, 16, 32
    N = B * T

    key = jax.random.PRNGKey(0)
    k_d, k_wh, k_bh, k_wx, k_bx = jax.random.split(key, 5)

    # Deterministic parameter init mirroring reset_parameters():
    # uniform(-stdv, stdv) with stdv = 1/sqrt(rnn_hid_size) (= 1/sqrt(W.size(0)))
    stdv_h = 1.0 / math.sqrt(RNN_HID)
    W_h = jax.random.uniform(k_wh, (RNN_HID, INPUT_SIZE), jnp.float32,
                             minval=-stdv_h, maxval=stdv_h)
    b_h = jax.random.uniform(k_bh, (RNN_HID,), jnp.float32,
                             minval=-stdv_h, maxval=stdv_h)

    # Second decay head (BRITS gamma_x: input_size -> input_size).
    stdv_x = 1.0 / math.sqrt(INPUT_SIZE)
    W_x = jax.random.uniform(k_wx, (INPUT_SIZE, INPUT_SIZE), jnp.float32,
                             minval=-stdv_x, maxval=stdv_x)
    b_x = jax.random.uniform(k_bx, (INPUT_SIZE,), jnp.float32,
                             minval=-stdv_x, maxval=stdv_x)

    # Input deltas (non-negative time gaps, like BRITS deltas), all timesteps.
    d = jax.random.uniform(k_d, (N, INPUT_SIZE), jnp.float32,
                           minval=0.0, maxval=5.0)

    # Single-head call (matches the original module's forward exactly).
    gamma_h = jax.block_until_ready(temporal_decay(d, W_h, b_h))
    ref_h = temporal_decay_ref(d, W_h, b_h)
    assert gamma_h.shape == (N, RNN_HID)
    assert jnp.allclose(gamma_h, ref_h, atol=1e-5, rtol=1e-5)

    # Fused two-head call (gamma_h + gamma_x in a single kernel launch).
    gamma_h2, gamma_x2 = temporal_decay_fused(d, (W_h, W_x), (b_h, b_x))
    gamma_h2 = jax.block_until_ready(gamma_h2)
    gamma_x2 = jax.block_until_ready(gamma_x2)
    ref_x = temporal_decay_ref(d, W_x, b_x)
    assert gamma_h2.shape == (N, RNN_HID)
    assert gamma_x2.shape == (N, INPUT_SIZE)
    assert jnp.allclose(gamma_h2, ref_h, atol=1e-5, rtol=1e-5)
    assert jnp.allclose(gamma_x2, ref_x, atol=1e-5, rtol=1e-5)

    # Optional reduced-precision operand path (f32 accumulate + f32 epilogue):
    # halves d/W HBM bytes; tolerance loosened accordingly.
    gamma_bf16 = jax.block_until_ready(
        temporal_decay(d, W_h, b_h, compute_dtype=jnp.bfloat16))
    assert gamma_bf16.shape == (N, RNN_HID)
    assert jnp.allclose(gamma_bf16, ref_h, atol=5e-2, rtol=5e-2)

    print("KERNEL_OK")
</pallas_src>

<mosaic_0001>
module attributes {stable_mosaic.version = 11 : i64} {
  func.func @_temporal_decay_kernel(%arg0: i32, %arg1: memref<96x16xf32, #tpu.memory_space<vmem>>, %arg2: memref<32x16xf32, #tpu.memory_space<vmem>>, %arg3: memref<1x32xf32, #tpu.memory_space<vmem>>, %arg4: memref<96x32xf32, #tpu.memory_space<vmem>>) attributes {dimension_semantics = [#tpu.dimension_semantics<parallel>], iteration_bounds = array<i64: 2>, scalar_prefetch = 0 : i64, scratch_operands = 0 : i64, tpu.core_type = #tpu.core_type<tc>, window_params = [{transform_indices = @transform_0, window_bounds = array<i64: 96, 16>}, {pipeline_mode = #tpu.pipeline_mode<synchronous>, transform_indices = @transform_1, window_bounds = array<i64: 32, 16>}, {pipeline_mode = #tpu.pipeline_mode<synchronous>, transform_indices = @transform_2, window_bounds = array<i64: 1, 32>}, {transform_indices = @transform_3, window_bounds = array<i64: 96, 32>}]} {
    %c0 = arith.constant 0 : index
    %c0_0 = arith.constant 0 : index
    %0 = vector.load %arg1[%c0, %c0_0] : memref<96x16xf32, #tpu.memory_space<vmem>>, vector<96x16xf32>
    %c0_1 = arith.constant 0 : index
    %c0_2 = arith.constant 0 : index
    %1 = vector.load %arg2[%c0_1, %c0_2] : memref<32x16xf32, #tpu.memory_space<vmem>>, vector<32x16xf32>
    %cst = arith.constant dense<0.000000e+00> : vector<96x32xf32>
    %2 = tpu.matmul %0, %1, %cst {dimension_numbers = #tpu.dot_dimension_numbers<[1], [1], [0], [0], [0, 0, 1, 0], [], []>} : vector<96x16xf32>, vector<32x16xf32>, vector<96x32xf32> -> vector<96x32xf32>
    %c0_3 = arith.constant 0 : index
    %c0_4 = arith.constant 0 : index
    %3 = vector.load %arg3[%c0_3, %c0_4] : memref<1x32xf32, #tpu.memory_space<vmem>>, vector<1x32xf32>
    %4 = vector.broadcast %3 : vector<1x32xf32> to vector<96x32xf32>
    %5 = arith.addf %2, %4 : vector<96x32xf32>
    %cst_5 = arith.constant 0.000000e+00 : f32
    %6 = vector.broadcast %cst_5 : f32 to vector<96x32xf32>
    %7 = arith.maximumf %5, %6 : vector<96x32xf32>
    %cst_6 = arith.constant 0.000000e+00 : f32
    %8 = vector.broadcast %cst_6 : f32 to vector<96x32xf32>
    %9 = arith.subf %8, %7 : vector<96x32xf32>
    %10 = math.exp %9 : vector<96x32xf32>
    %c0_7 = arith.constant 0 : index
    %c0_8 = arith.constant 0 : index
    %11 = vector.load %arg4[%c0_7, %c0_8] : memref<96x32xf32, #tpu.memory_space<vmem>>, vector<96x32xf32>
    tpu.vector_store %arg4[%c0_7, %c0_8], %10 {strides = array<i32>} : memref<96x32xf32, #tpu.memory_space<vmem>>, vector<96x32xf32>,
    return
  }
  func.func @transform_0(%arg0: i32) -> (i32, i32) {
    %c0_i32 = arith.constant 0 : i32
    %c0_i32_0 = arith.constant 0 : i32
    return %arg0, %c0_i32 : i32, i32
  }
  func.func @transform_1(%arg0: i32) -> (i32, i32) {
    %c0_i32 = arith.constant 0 : i32
    %c0_i32_0 = arith.constant 0 : i32
    %c0_i32_1 = arith.constant 0 : i32
    return %c0_i32, %c0_i32_0 : i32, i32
  }
  func.func @transform_2(%arg0: i32) -> (i32, i32) {
    %c0_i32 = arith.constant 0 : i32
    %c0_i32_0 = arith.constant 0 : i32
    %c0_i32_1 = arith.constant 0 : i32
    return %c0_i32, %c0_i32_0 : i32, i32
  }
  func.func @transform_3(%arg0: i32) -> (i32, i32) {
    %c0_i32 = arith.constant 0 : i32
    %c0_i32_0 = arith.constant 0 : i32
    return %arg0, %c0_i32 : i32, i32
  }
}

</mosaic_0001>

<llo_original>
// kernel: tpu_custom_call.1
$region0: #{tpu_custom_call.1}
  #allocation0 [shape = 'u32[]', space=smem, size = 0x4, offset = 0x4, fixed_abs, tag = 'smem constant byte address 0x4 - core index']
  #allocation1 [shape = 'u32[72,128]{1,0:T(1,128)}', space=vmem, size = 0x9000, scoped, tag = 'internal scratch']
  %s0 = inlined_call_operand.vmem [shape: f32[192,16], index: 0, kind: input, shape index: {}]
  %s1 = inlined_call_operand.vmem [shape: f32[32,16], index: 1, kind: input, shape index: {}]
  %s2 = inlined_call_operand.vmem [shape: f32[1,32], index: 2, kind: input, shape index: {}]
  %s3 = inlined_call_operand.vmem [shape: f32[192,32], index: 3, kind: output, shape index: {}]
  %s4 = sld [smem:[#allocation0]]
  $region45: #{tpu_custom_call.1} parent=0
    _
  %s6 = ssub.s32 1, %s4
  %s7 = scalar_select 0, %s6, %s4
  loop: start=0, step=1, limit=4
  $region2: #{tpu_custom_call.1} parent=0 // loop_pre_header
    _
  $region3: #{tpu_custom_call.1} parent=0 // loop_header
    %s9 = sphi 0, %s13
    %p10 = scmp.ge.s32.totalorder %s9, 4
    %s19 = sphi 0, %s21
    %s22 = sphi 0, %s19
    %s23 = sphi 0, %s22
    %s39 = sphi 0, %s23
    %s43 = sphi 0, %s43
    %s45 = sphi 0, %s43
    %s46 = sphi 0, %s45
    %s60 = sphi 0, %s46
    %s64 = sphi 0, %s64
    %s66 = sphi 0, %s64
    %s67 = sphi 0, %s66
    %s81 = sphi 0, %s67
    %s87 = sphi 0, %s89
    %s90 = sphi 0, %s87
    %s91 = sphi 0, %s90
    %s107 = sphi 0, %s91
  $region4: #{tpu_custom_call.1} parent=0 // loop_header_branch
    %12 = sbr.rel (%p10) target = $region8
  $region5: #{tpu_custom_call.1} parent=0 // loop_body
    %s14 = ssub.s32 %s9, 1
    %s15 = ssub.s32 %s9, 2
    %s16 = sadd.s32 %s9, 1
    %s17 = ssub.s32 %s9, %s16
    %p18 = scmp.eq.s32.totalorder %s17, 0
    %s20 = sadd.s32 %s19, 1
    %s21 = scalar_select %p18, %s19, %s20
    %p24 = pneg %p18
    %p25 = scmp.eq.s32.totalorder %s9, 1
    %p26 = por %p24, %p25
    %p27 = scmp.ne.s32.totalorder %s19, %s22
    %p28 = scmp.eq.s32.totalorder %s9, 0
    %p29 = por %p27, %p28
    %p30 = scmp.ne.s32.totalorder %s19, %s22
    %p31 = scmp.eq.s32.totalorder %s14, 1
    %p32 = por %p30, %p31
    %p33 = scmp.ne.s32.totalorder %s22, %s23
    %p34 = scmp.eq.s32.totalorder %s14, 0
    %p35 = por %p33, %p34
    %p36 = scmp.ne.s32.totalorder %s22, %s23
    %p37 = scmp.eq.s32.totalorder %s15, 1
    %p38 = por %p36, %p37
    %p40 = scmp.ne.s32.totalorder %s23, %s39
    %p41 = scmp.eq.s32.totalorder %s15, 0
    %p42 = por %p40, %p41
    %s44 = sadd.s32 %s43, 1
    %p47 = scmp.eq.s32.totalorder %s9, 1
    %p48 = scmp.ne.s32.totalorder %s43, %s45
    %p49 = scmp.eq.s32.totalorder %s9, 0
    %p50 = por %p48, %p49
    %p51 = scmp.ne.s32.totalorder %s43, %s45
    %p52 = scmp.eq.s32.totalorder %s14, 1
    %p53 = por %p51, %p52
    %p54 = scmp.ne.s32.totalorder %s45, %s46
    %p55 = scmp.eq.s32.totalorder %s14, 0
    %p56 = por %p54, %p55
    %p57 = scmp.ne.s32.totalorder %s45, %s46
    %p58 = scmp.eq.s32.totalorder %s15, 1
    %p59 = por %p57, %p58
    %p61 = scmp.ne.s32.totalorder %s46, %s60
    %p62 = scmp.eq.s32.totalorder %s15, 0
    %p63 = por %p61, %p62
    %s65 = sadd.s32 %s64, 1
    %p68 = scmp.eq.s32.totalorder %s9, 1
    %p69 = scmp.ne.s32.totalorder %s64, %s66
    %p70 = scmp.eq.s32.totalorder %s9, 0
    %p71 = por %p69, %p70
    %p72 = scmp.ne.s32.totalorder %s64, %s66
    %p73 = scmp.eq.s32.totalorder %s14, 1
    %p74 = por %p72, %p73
    %p75 = scmp.ne.s32.totalorder %s66, %s67
    %p76 = scmp.eq.s32.totalorder %s14, 0
    %p77 = por %p75, %p76
    %p78 = scmp.ne.s32.totalorder %s66, %s67
    %p79 = scmp.eq.s32.totalorder %s15, 1
    %p80 = por %p78, %p79
    %p82 = scmp.ne.s32.totalorder %s67, %s81
    %p83 = scmp.eq.s32.totalorder %s15, 0
    %p84 = por %p82, %p83
    %s85 = ssub.s32 %s9, %s16
    %p86 = scmp.eq.s32.totalorder %s85, 0
    %s88 = sadd.s32 %s87, 1
    %s89 = scalar_select %p86, %s87, %s88
    %p92 = pneg %p86
    %p93 = scmp.eq.s32.totalorder %s9, 1
    %p94 = por %p92, %p93
    %p95 = scmp.ne.s32.totalorder %s87, %s90
    %p96 = scmp.eq.s32.totalorder %s9, 0
    %p97 = por %p95, %p96
    %p98 = scmp.ne.s32.totalorder %s87, %s90
    %p99 = scmp.eq.s32.totalorder %s14, 1
    %p100 = por %p98, %p99
    %p101 = scmp.ne.s32.totalorder %s90, %s91
    %p102 = scmp.eq.s32.totalorder %s14, 0
    %p103 = por %p101, %p102
    %p104 = scmp.ne.s32.totalorder %s90, %s91
    %p105 = scmp.eq.s32.totalorder %s15, 1
    %p106 = por %p104, %p105
    %p108 = scmp.ne.s32.totalorder %s91, %s107
    %p109 = scmp.eq.s32.totalorder %s15, 0
    %p110 = por %p108, %p109
    %p111 = scmp.le.s32.totalorder 1, %s9
    %p112 = scmp.lt.s32.totalorder %s9, 3
    %p113 = pnand %p111, %p112
    %p114 = pneg %p113
    // Predicated region
    $region9: #{tpu_custom_call.1} parent=5 // pred_check
      _
    $region10: #{tpu_custom_call.1} parent=5 // pred_check_branch
      %116 = sbr.rel (%p113) target = $region12
    $region11: #{tpu_custom_call.1} parent=5 // pred_region
      %s117 = ssub.s32 %s9, 1
      // Predicated region
      $region13: #{tpu_custom_call.1} parent=11 // pred_check
        %p118 = pneg %p56
      $region14: #{tpu_custom_call.1} parent=11 // pred_check_branch
        %120 = sbr.rel (%p118) target = $region16
      $region15: #{tpu_custom_call.1} parent=11 // pred_region
        _
      $region16: #{tpu_custom_call.1} parent=11 // pred_fallthru
        _
      // Predicated region
      $region17: #{tpu_custom_call.1} parent=11 // pred_check
        %p121 = pneg %p77
      $region18: #{tpu_custom_call.1} parent=11 // pred_check_branch
        %123 = sbr.rel (%p121) target = $region20
      $region19: #{tpu_custom_call.1} parent=11 // pred_region
        _
      $region20: #{tpu_custom_call.1} parent=11 // pred_fallthru
        _
    $region12: #{tpu_custom_call.1} parent=5 // pred_fallthru
      _
    %p124 = scmp.lt.s32.totalorder %s9, 2
    // Predicated region
    $region21: #{tpu_custom_call.1} parent=5 // pred_check
      %p125 = pneg %p124
    $region22: #{tpu_custom_call.1} parent=5 // pred_check_branch
      %127 = sbr.rel (%p125) target = $region24
    $region23: #{tpu_custom_call.1} parent=5 // pred_region
      // Predicated region
      $region25: #{tpu_custom_call.1} parent=23 // pred_check
        %p128 = pneg %p29
      $region26: #{tpu_custom_call.1} parent=23 // pred_check_branch
        %130 = sbr.rel (%p128) target = $region28
      $region27: #{tpu_custom_call.1} parent=23 // pred_region
        %s131 = smul.u32 12, %s9
        %p132 = scmp.lt.s32.totalorder %s131, 23
        %s133 = scalar_select %p132, %s131, 23
        %s134 = smul.addr %s133, 8
        %s135 = scalar_lea.vmem %s0, %s134
        %s136 = smul.u32 12, %s9
      $region28: #{tpu_custom_call.1} parent=23 // pred_fallthru
        _
    $region24: #{tpu_custom_call.1} parent=5 // pred_fallthru
      _
    %p137 = scmp.le.s32.totalorder 1, %s9
    %p138 = scmp.lt.s32.totalorder %s9, 3
    %p139 = pnand %p137, %p138
    %p140 = pneg %p139
    // Predicated region
    $region29: #{tpu_custom_call.1} parent=5 // pred_check
      _
    $region30: #{tpu_custom_call.1} parent=5 // pred_check_branch
      %142 = sbr.rel (%p139) target = $region32
    $region31: #{tpu_custom_call.1} parent=5 // pred_region
      %s143 = ssub.s32 %s9, 1
      %s144 = smul.u32 12, %s14
      %p145 = scmp.lt.s32.totalorder %s144, 23
      %s146 = scalar_select %p145, %s144, 23
      %s147 = smul.addr %s146, 8
      %s148 = scalar_lea.vmem %s0, %s147
      %p149 = pneg %p35
      %p150 = pneg %p32
      %p151 = pneg %p56
      %p152 = pneg %p53
      %p153 = pneg %p77
      %p154 = pneg %p74
      %p155 = pneg %p103
      %p156 = pneg %p100
      %s157 = smul.u32 12, %s14
      %p158 = scmp.lt.s32.totalorder %s157, 23
      %s159 = scalar_select %p158, %s157, 23
      %s160 = smul.addr %s159, 8
      %s161 = scalar_lea.vmem %s3, %s160
      %s162 = smul.u32 12, %s14
      %p163 = scmp.lt.s32.totalorder %s162, 23
      %s164 = scalar_select %p163, %s162, 23
      %s165 = smul.addr %s164, 8
      %s166 = scalar_lea.vmem %s0, %s165
      %s167 = smul.u32 12, %s14
      %s168 = smul.u32 12, %s14
      %p169 = scmp.lt.s32.totalorder %s168, 23
      %s170 = scalar_select %p169, %s168, 23
      %s171 = smul.addr %s170, 8
      %s172 = scalar_lea.vmem %s3, %s171
      %s173 = smul.u32 12, %s14
      %v174 = vld [vmem:[%s166] sm:$0xff]
      %v175 = vld [vmem:[%s166 + $0x8] sm:$0xff]
      %v176 = vld [vmem:[%s166 + $0x10] sm:$0xff]
      %v177 = vld [vmem:[%s166 + $0x18] sm:$0xff]
      %v178 = vld [vmem:[%s166 + $0x20] sm:$0xff]
      %v179 = vld [vmem:[%s166 + $0x28] sm:$0xff]
      %v180 = vld [vmem:[%s166 + $0x30] sm:$0xff]
      %v181 = vld [vmem:[%s166 + $0x38] sm:$0xff]
      %v182 = vld [vmem:[%s166 + $0x40] sm:$0xff]
      %v183 = vld [vmem:[%s166 + $0x48] sm:$0xff]
      %v184 = vld [vmem:[%s166 + $0x50] sm:$0xff]
      %v185 = vld [vmem:[%s166 + $0x58] sm:$0xff]
      %v186 = vld [vmem:[%s1] sm:$0xff]
      %v187 = vld [vmem:[%s1 + $0x8] sm:$0xff]
      %v188 = vld [vmem:[%s1 + $0x10] sm:$0xff]
      %v189 = vld [vmem:[%s1 + $0x18] sm:$0xff]
      %v190 = vld [vmem:[%s2] sm:$0x1]
      %v192 = vperm.slane %v190, 0
      %vm194 = vcmask 130048
      %v196 = vsel %vm194, %v174, 0
      %v199 = vsel %vm194, %v175, 0
      %v202 = vsel %vm194, %v176, 0
      %v205 = vsel %vm194, %v177, 0
      %v208 = vsel %vm194, %v178, 0
      %v211 = vsel %vm194, %v179, 0
      %v214 = vsel %vm194, %v180, 0
      %v217 = vsel %vm194, %v181, 0
      %v220 = vsel %vm194, %v182, 0
      %v223 = vsel %vm194, %v183, 0
      %v226 = vsel %vm194, %v184, 0
      %v229 = vsel %vm194, %v185, 0
      %v232 = vsel %vm194, %v186, 0
      %v235 = vsel %vm194, %v187, 0
      %v238 = vsel %vm194, %v188, 0
      %v241 = vsel %vm194, %v189, 0
      %243 = vmatpush.xpose.msra.mxu0 0.0
      %244 = vmatpush.xpose.msra.mxu0 0.0
      %245 = vmatpush.xpose.msra.mxu0 0.0
      %246 = vmatpush.xpose.msra.mxu0 0.0
      %247 = vmatpush.xpose.msra.mxu0 0.0
      %248 = vmatpush.xpose.msra.mxu0 0.0
      %249 = vmatpush.xpose.msra.mxu0 0.0
      %250 = vmatpush.xpose.msra.mxu0 0.0
      %251 = vmatpush.xpose.msra.mxu0 0.0
      %252 = vmatpush.xpose.msra.mxu0 0.0
      %253 = vmatpush.xpose.msra.mxu0 0.0
      %254 = vmatpush.xpose.msra.mxu0 0.0
      %255 = vmatpush.xpose.msra.mxu0 %v241
      %256 = vmatpush.xpose.msra.mxu0 %v238
      %257 = vmatpush.xpose.msra.mxu0 %v235
      %258 = vmatpush.xpose.msra.mxu0 %v232
      %259 = vmatmul.f32.gmra.mxu0 %v196
      %v260 = vpop.f32.mrf.mxu0
      %v261 = vadd.f32 %v192, %v260
      %262 = vmatmul.f32.gmra.mxu0 %v199
      %v263 = vpop.f32.mrf.mxu0
      %v264 = vadd.f32 %v192, %v263
      %265 = vmatmul.f32.gmra.mxu0 %v202
      %v266 = vpop.f32.mrf.mxu0
      %v267 = vadd.f32 %v192, %v266
      %268 = vmatmul.f32.gmra.mxu0 %v205
      %v269 = vpop.f32.mrf.mxu0
      %v270 = vadd.f32 %v192, %v269
      %271 = vmatmul.f32.gmra.mxu0 %v208
      %v272 = vpop.f32.mrf.mxu0
      %v273 = vadd.f32 %v192, %v272
      %274 = vmatmul.f32.gmra.mxu0 %v211
      %v275 = vpop.f32.mrf.mxu0
      %v276 = vadd.f32 %v192, %v275
      %277 = vmatmul.f32.gmra.mxu0 %v214
      %v278 = vpop.f32.mrf.mxu0
      %v279 = vadd.f32 %v192, %v278
      %280 = vmatmul.f32.gmra.mxu0 %v217
      %v281 = vpop.f32.mrf.mxu0
      %v282 = vadd.f32 %v192, %v281
      %283 = vmatmul.f32.gmra.mxu0 %v220
      %v284 = vpop.f32.mrf.mxu0
      %v285 = vadd.f32 %v192, %v284
      %286 = vmatmul.f32.gmra.mxu0 %v223
      %v287 = vpop.f32.mrf.mxu0
      %v288 = vadd.f32 %v192, %v287
      %289 = vmatmul.f32.gmra.mxu0 %v226
      %v290 = vpop.f32.mrf.mxu0
      %v291 = vadd.f32 %v192, %v290
      %292 = vmatmul.f32.gmra.mxu0 %v229
      %v293 = vpop.f32.mrf.mxu0
      %v294 = vadd.f32 %v192, %v293
      %295 = vdwg.mxu0
      %v296 = vmax.f32 %v261, 0.0
      %v297 = vmax.f32 %v264, 0.0
      %v298 = vmax.f32 %v267, 0.0
      %v299 = vmax.f32 %v270, 0.0
      %v300 = vmax.f32 %v273, 0.0
      %v301 = vmax.f32 %v276, 0.0
      %v302 = vmax.f32 %v279, 0.0
      %v303 = vmax.f32 %v282, 0.0
      %v304 = vmax.f32 %v285, 0.0
      %v305 = vmax.f32 %v288, 0.0
      %v306 = vmax.f32 %v291, 0.0
      %v307 = vmax.f32 %v294, 0.0
      %v308 = vsub.f32 0.0, %v296
      %v309 = vsub.f32 0.0, %v297
      %v310 = vsub.f32 0.0, %v298
      %v311 = vsub.f32 0.0, %v299
      %v312 = vsub.f32 0.0, %v300
      %v313 = vsub.f32 0.0, %v301
      %v314 = vsub.f32 0.0, %v302
      %v315 = vsub.f32 0.0, %v303
      %v316 = vsub.f32 0.0, %v304
      %v317 = vsub.f32 0.0, %v305
      %v318 = vsub.f32 0.0, %v306
      %v319 = vsub.f32 0.0, %v307
      %v320 = vmul.f32 %v308, 1.442695
      %v321 = vpow.pop %v320
      %v322 = vmul.f32 %v309, 1.442695
      %v323 = vpow.pop %v322
      %v324 = vmul.f32 %v310, 1.442695
      %v325 = vpow.pop %v324
      %v326 = vmul.f32 %v311, 1.442695
      %v327 = vpow.pop %v326
      %v328 = vmul.f32 %v312, 1.442695
      %v329 = vpow.pop %v328
      %v330 = vmul.f32 %v313, 1.442695
      %v331 = vpow.pop %v330
      %v332 = vmul.f32 %v314, 1.442695
      %v333 = vpow.pop %v332
      %v334 = vmul.f32 %v315, 1.442695
      %v335 = vpow.pop %v334
      %v336 = vmul.f32 %v316, 1.442695
      %v337 = vpow.pop %v336
      %v338 = vmul.f32 %v317, 1.442695
      %v339 = vpow.pop %v338
      %v340 = vmul.f32 %v318, 1.442695
      %v341 = vpow.pop %v340
      %v342 = vmul.f32 %v319, 1.442695
      %v343 = vpow.pop %v342
      %vm344 = vcmask 261120
      %345 = vst.msk [vmem:[%s172] sm:$0xff] %vm344, %v321
      %346 = vst.msk [vmem:[%s172 + $0x8] sm:$0xff] %vm344, %v323
      %347 = vst.msk [vmem:[%s172 + $0x10] sm:$0xff] %vm344, %v325
      %348 = vst.msk [vmem:[%s172 + $0x18] sm:$0xff] %vm344, %v327
      %349 = vst.msk [vmem:[%s172 + $0x20] sm:$0xff] %vm344, %v329
      %350 = vst.msk [vmem:[%s172 + $0x28] sm:$0xff] %vm344, %v331
      %351 = vst.msk [vmem:[%s172 + $0x30] sm:$0xff] %vm344, %v333
      %352 = vst.msk [vmem:[%s172 + $0x38] sm:$0xff] %vm344, %v335
      %353 = vst.msk [vmem:[%s172 + $0x40] sm:$0xff] %vm344, %v337
      %354 = vst.msk [vmem:[%s172 + $0x48] sm:$0xff] %vm344, %v339
      %355 = vst.msk [vmem:[%s172 + $0x50] sm:$0xff] %vm344, %v341
      %356 = vst.msk [vmem:[%s172 + $0x58] sm:$0xff] %vm344, %v343
      %s357 = smul.u32 12, %s14
      %p358 = scmp.lt.s32.totalorder %s357, 23
      %s359 = scalar_select %p358, %s357, 23
      %s360 = smul.addr %s359, 8
      %s361 = scalar_lea.vmem %s3, %s360
      // Predicated region
      $region33: #{tpu_custom_call.1} parent=31 // pred_check
        %p362 = pneg %p100
      $region34: #{tpu_custom_call.1} parent=31 // pred_check_branch
        %364 = sbr.rel (%p362) target = $region36
      $region35: #{tpu_custom_call.1} parent=31 // pred_region
        %s365 = smul.u32 12, %s14
      $region36: #{tpu_custom_call.1} parent=31 // pred_fallthru
        _
    $region32: #{tpu_custom_call.1} parent=5 // pred_fallthru
      _
    %p366 = scmp.le.s32.totalorder 2, %s9
    // Predicated region
    $region37: #{tpu_custom_call.1} parent=5 // pred_check
      %p367 = pneg %p366
    $region38: #{tpu_custom_call.1} parent=5 // pred_check_branch
      %369 = sbr.rel (%p367) target = $region40
    $region39: #{tpu_custom_call.1} parent=5 // pred_region
      %s370 = ssub.s32 %s9, 2
      // Predicated region
      $region41: #{tpu_custom_call.1} parent=39 // pred_check
        %p371 = pneg %p106
      $region42: #{tpu_custom_call.1} parent=39 // pred_check_branch
        %373 = sbr.rel (%p371) target = $region44
      $region43: #{tpu_custom_call.1} parent=39 // pred_region
        %s374 = smul.u32 12, %s15
        %p375 = scmp.lt.s32.totalorder %s374, 23
        %s376 = scalar_select %p375, %s374, 23
        %s377 = smul.addr %s376, 8
        %s378 = scalar_lea.vmem %s3, %s377
      $region44: #{tpu_custom_call.1} parent=39 // pred_fallthru
        _
    $region40: #{tpu_custom_call.1} parent=5 // pred_fallthru
      _
  $region6: #{tpu_custom_call.1} parent=0 // loop_footer
    %s13 = sadd.s32 1, %s9
  $region7: #{tpu_custom_call.1} parent=0 // loop_footer_branch
    %8 = sbr.rel target = $region3
  $region8: #{tpu_custom_call.1} parent=0 // loop_exit
    _

</llo_original>
